<compile_context>
chip_gen: v7x
topology: tpu7x:2x2x1
jax: 0.10.0
libtpu: 0.0.40
codegen_flags: <defaults>
</compile_context>

<pallas_src>
import functools

import jax
import jax.numpy as jnp
from jax.experimental import pallas as pl
from jax.experimental.pallas import tpu as pltpu


# ----------------------------------------------------------------------------
# Fixed (module-defined) hidden widths and packed-slab layout constants
# ----------------------------------------------------------------------------
H1 = 21            # fc1 out features
H2 = 50            # fc2 out features
LANE = 128         # lane width / padded feature size

OBS_P = LANE       # rows    0..127 of slab = W1 (obs x 21, zero padded)
H1_P = LANE        # rows  128..255 of slab = W2 (21  x 50, zero padded)
H2_P = LANE        # rows  256..383 of slab = W3 (50  x act, zero padded)
BIAS_ROWS = 8      # rows  384..391: row 0 = b1, row 1 = b2, row 2 = b3
P_ROWS = OBS_P + H1_P + H2_P + BIAS_ROWS   # 392

_W1_OFF = 0
_W2_OFF = OBS_P
_W3_OFF = OBS_P + H1_P
_B_OFF = OBS_P + H1_P + H2_P


def _round_up(n, m):
    return ((n + m - 1) // m) * m


def _cdiv(a, b):
    return -(-a // b)


# ----------------------------------------------------------------------------
# Kernel: one batch tile, all params resident, narrow (lane-exact) I/O blocks
# ----------------------------------------------------------------------------
def _policy_kernel(x_ref, p_ref, mean_ref, *, compute_dtype):
    obs = x_ref.shape[1]        # static (sublane-aligned contraction dim)
    act = mean_ref.shape[1]     # static
    f32 = jnp.float32

    x = x_ref[...].astype(compute_dtype)                          # (TB, obs)

    w1 = p_ref[_W1_OFF:_W1_OFF + obs, :].astype(compute_dtype)    # (obs, 128)
    w2 = p_ref[_W2_OFF:_W2_OFF + H1_P, :].astype(compute_dtype)   # (128, 128)
    w3 = p_ref[_W3_OFF:_W3_OFF + H2_P, :].astype(compute_dtype)   # (128, 128)
    b = p_ref[_B_OFF:_B_OFF + BIAS_ROWS, :]                       # (8, 128) f32
    b1 = b[0:1, :]
    b2 = b[1:2, :]
    b3 = b[2:3, :]

    h1 = jnp.maximum(jnp.dot(x, w1, preferred_element_type=f32) + b1, 0.0)
    h2 = jnp.maximum(
        jnp.dot(h1.astype(compute_dtype), w2, preferred_element_type=f32) + b2,
        0.0)
    m = jnp.dot(h2.astype(compute_dtype), w3, preferred_element_type=f32) + b3

    mean_ref[...] = m[:, :act].astype(mean_ref.dtype)


# ----------------------------------------------------------------------------
# One-time parameter packing (hoisted out of the forward path)
# ----------------------------------------------------------------------------
def pack_params(params):
    """Build the lane-dense (392,128) f32 slab and std once."""
    w1, b1, w2, b2, w3, b3, log_std = params
    obs = w1.shape[0]
    act = w3.shape[1]
    assert obs <= OBS_P and act <= LANE, "packed layout assumes dims <= 128"

    slab = jnp.zeros((P_ROWS, LANE), jnp.float32)
    slab = slab.at[_W1_OFF:_W1_OFF + obs, :H1].set(w1.astype(jnp.float32))
    slab = slab.at[_W2_OFF:_W2_OFF + H1, :H2].set(w2.astype(jnp.float32))
    slab = slab.at[_W3_OFF:_W3_OFF + H2, :act].set(w3.astype(jnp.float32))
    slab = slab.at[_B_OFF + 0, :H1].set(b1.astype(jnp.float32))
    slab = slab.at[_B_OFF + 1, :H2].set(b2.astype(jnp.float32))
    slab = slab.at[_B_OFF + 2, :act].set(b3.astype(jnp.float32))
    std = jnp.exp(log_std.astype(jnp.float32))   # constant w.r.t. x -> hoisted
    return slab, std


# ----------------------------------------------------------------------------
# Batch-tile choice: big tiles, and >=2 (even) grid steps for v7x's 2 TCs
# ----------------------------------------------------------------------------
def _choose_tile(batch, cap):
    b8 = _round_up(max(batch, 1), 8)
    if b8 <= cap:
        return b8
    steps = _cdiv(b8, cap)
    if steps % 2:
        steps += 1
    return _round_up(_cdiv(b8, steps), 8)


# ----------------------------------------------------------------------------
# Tiny-batch fallback: plain fused XLA dots (pallas_call overhead dominates)
# ----------------------------------------------------------------------------
def _xla_forward(x, slab, act, compute_dtype):
    f32 = jnp.float32
    obs = x.shape[1]
    prec = jax.lax.Precision.HIGHEST if compute_dtype == jnp.float32 else None
    w1 = slab[_W1_OFF:_W1_OFF + obs, :].astype(compute_dtype)
    w2 = slab[_W2_OFF:_W2_OFF + H1_P, :].astype(compute_dtype)
    w3 = slab[_W3_OFF:_W3_OFF + H2_P, :].astype(compute_dtype)
    b = slab[_B_OFF:_B_OFF + 3, :]
    h1 = jax.nn.relu(
        jnp.dot(x.astype(compute_dtype), w1, precision=prec,
                preferred_element_type=f32) + b[0])
    h2 = jax.nn.relu(
        jnp.dot(h1.astype(compute_dtype), w2, precision=prec,
                preferred_element_type=f32) + b[1])
    m = jnp.dot(h2.astype(compute_dtype), w3, precision=prec,
                preferred_element_type=f32) + b[2]
    return m[:, :act]


# ----------------------------------------------------------------------------
# Forward wrapper
# ----------------------------------------------------------------------------
def policy_forward(x, slab, std, *, use_bf16=True, tb_cap=1024,
                   min_pallas_batch=64, force_pallas=False):
    """x: (B, obs_dims) f32; slab/std from pack_params(). Returns (mean, std)."""
    B, obs = x.shape
    act = std.shape[0]
    compute_dtype = jnp.bfloat16 if use_bf16 else jnp.float32

    if B < min_pallas_batch and not force_pallas:
        return _xla_forward(x, slab, act, compute_dtype), std

    # Keep the contraction dim sublane-aligned; a no-op when obs % 8 == 0.
    obs_k = _round_up(obs, 8)
    if obs_k != obs:
        x = jnp.pad(x, ((0, 0), (0, obs_k - obs)))

    TB = _choose_tile(B, tb_cap)
    B_pad = _round_up(B, TB)
    if B_pad != B:
        x = jnp.pad(x, ((0, B_pad - B), (0, 0)))

    kernel = functools.partial(_policy_kernel, compute_dtype=compute_dtype)
    mean_p = pl.pallas_call(
        kernel,
        out_shape=jax.ShapeDtypeStruct((B_pad, act), jnp.float32),
        grid=(B_pad // TB,),
        in_specs=[
            pl.BlockSpec((TB, obs_k), lambda i: (i, 0)),      # x: streamed
            pl.BlockSpec((P_ROWS, LANE), lambda i: (0, 0)),   # params: resident
        ],
        out_specs=pl.BlockSpec((TB, act), lambda i: (i, 0)),
        compiler_params=pltpu.CompilerParams(
            dimension_semantics=("parallel",)),
    )(x, slab)

    mean = mean_p if B_pad == B else mean_p[:B]
    return mean, std


# ----------------------------------------------------------------------------
# Deterministic parameter init (mirrors nn.Linear default: U(-1/sqrt(in), +))
# ----------------------------------------------------------------------------
def init_params(key, obs_dims, action_dims):
    def linear(key, fan_in, fan_out):
        kw, kb = jax.random.split(key)
        bound = 1.0 / jnp.sqrt(fan_in)
        # stored already transposed: (in, out)
        w = jax.random.uniform(kw, (fan_in, fan_out), jnp.float32, -bound, bound)
        b = jax.random.uniform(kb, (fan_out,), jnp.float32, -bound, bound)
        return w, b

    k1, k2, k3 = jax.random.split(key, 3)
    w1, b1 = linear(k1, obs_dims, H1)
    w2, b2 = linear(k2, H1, H2)
    w3, b3 = linear(k3, H2, action_dims)
    log_std = jnp.zeros((action_dims,), jnp.float32)
    return (w1, b1, w2, b2, w3, b3, log_std)


# ----------------------------------------------------------------------------
# Pure-JAX reference for correctness check
# ----------------------------------------------------------------------------
def policy_forward_ref(x, params):
    w1, b1, w2, b2, w3, b3, log_std = params
    hp = jax.lax.Precision.HIGHEST
    h1 = jax.nn.relu(jnp.dot(x, w1, precision=hp) + b1)
    h2 = jax.nn.relu(jnp.dot(h1, w2, precision=hp) + b2)
    mean = jnp.dot(h2, w3, precision=hp) + b3
    return mean, jnp.exp(log_std)


if __name__ == "__main__":
    obs_dims, action_dims = 8, 4

    key = jax.random.PRNGKey(0)
    kx, kp, kx2 = jax.random.split(key, 3)
    params = init_params(kp, obs_dims, action_dims)

    # Pack once (hoisted out of the forward path).
    slab, std_packed = pack_params(params)

    fwd = jax.jit(policy_forward,
                  static_argnames=("use_bf16", "tb_cap", "min_pallas_batch",
                                   "force_pallas"))

    # 1) Small batch, f32 Pallas path (force past the tiny-batch bypass).
    x_small = jax.random.normal(kx, (2, obs_dims), jnp.float32)
    mean_f32, std = fwd(x_small, slab, std_packed,
                        use_bf16=False, force_pallas=True)
    jax.block_until_ready((mean_f32, std))

    mean_ref, std_ref = policy_forward_ref(x_small, params)
    assert mean_f32.shape == (2, action_dims)
    assert std.shape == (action_dims,)
    # f32 MXU pass decomposition can differ slightly from XLA HIGHEST.
    assert jnp.allclose(mean_f32, mean_ref, atol=1e-3, rtol=1e-3)
    assert jnp.allclose(std, std_ref, atol=1e-6)

    # Tiny-batch XLA bypass must agree too (same math, no Pallas launch).
    mean_xla, _ = fwd(x_small, slab, std_packed, use_bf16=False)
    assert jnp.allclose(mean_xla, mean_ref, atol=1e-5, rtol=1e-5)

    # 2) Larger batch, default bf16 MXU path (looser tolerance vs f32 ref).
    x_big = jax.random.normal(kx2, (200, obs_dims), jnp.float32)
    mean_bf16, _ = fwd(x_big, slab, std_packed)
    jax.block_until_ready(mean_bf16)
    mean_big_ref, _ = policy_forward_ref(x_big, params)
    assert mean_bf16.shape == (200, action_dims)
    assert jnp.allclose(mean_bf16, mean_big_ref, atol=3e-2, rtol=3e-2)

    print("KERNEL_OK")
</pallas_src>

<mosaic_0001>
module attributes {stable_mosaic.version = 11 : i64} {
  func.func @_policy_kernel(%arg0: i32, %arg1: memref<8x8xf32, #tpu.memory_space<vmem>>, %arg2: memref<392x128xf32, #tpu.memory_space<vmem>>, %arg3: memref<8x4xf32, #tpu.memory_space<vmem>>) attributes {dimension_semantics = [#tpu.dimension_semantics<parallel>], iteration_bounds = array<i64: 1>, scalar_prefetch = 0 : i64, scratch_operands = 0 : i64, tpu.core_type = #tpu.core_type<tc>, window_params = [{transform_indices = @transform_0, window_bounds = array<i64: 8, 8>}, {pipeline_mode = #tpu.pipeline_mode<synchronous>, transform_indices = @transform_1, window_bounds = array<i64: 392, 128>}, {transform_indices = @transform_2, window_bounds = array<i64: 8, 4>}]} {
    %c0 = arith.constant 0 : index
    %c0_0 = arith.constant 0 : index
    %0 = vector.load %arg1[%c0, %c0_0] : memref<8x8xf32, #tpu.memory_space<vmem>>, vector<8x8xf32>
    %c0_1 = arith.constant 0 : index
    %c0_2 = arith.constant 0 : index
    %1 = vector.load %arg2[%c0_1, %c0_2] : memref<392x128xf32, #tpu.memory_space<vmem>>, vector<8x128xf32>
    %c128 = arith.constant 128 : index
    %c0_3 = arith.constant 0 : index
    %2 = vector.load %arg2[%c128, %c0_3] : memref<392x128xf32, #tpu.memory_space<vmem>>, vector<128x128xf32>
    %c256 = arith.constant 256 : index
    %c0_4 = arith.constant 0 : index
    %3 = vector.load %arg2[%c256, %c0_4] : memref<392x128xf32, #tpu.memory_space<vmem>>, vector<128x128xf32>
    %c384 = arith.constant 384 : index
    %c0_5 = arith.constant 0 : index
    %4 = vector.load %arg2[%c384, %c0_5] : memref<392x128xf32, #tpu.memory_space<vmem>>, vector<8x128xf32>
    %5 = vector.extract_strided_slice %4 {offsets = [0, 0], sizes = [1, 128], strides = [1, 1]} : vector<8x128xf32> to vector<1x128xf32>
    %6 = vector.extract_strided_slice %4 {offsets = [1, 0], sizes = [1, 128], strides = [1, 1]} : vector<8x128xf32> to vector<1x128xf32>
    %7 = vector.extract_strided_slice %4 {offsets = [2, 0], sizes = [1, 128], strides = [1, 1]} : vector<8x128xf32> to vector<1x128xf32>
    %cst = arith.constant dense<0.000000e+00> : vector<8x128xf32>
    %8 = tpu.matmul %0, %1, %cst {dimension_numbers = #tpu.dot_dimension_numbers<[1], [0], [0], [1], [0, 0, 1, 1], [], []>} : vector<8x8xf32>, vector<8x128xf32>, vector<8x128xf32> -> vector<8x128xf32>
    %9 = vector.broadcast %5 : vector<1x128xf32> to vector<8x128xf32>
    %10 = arith.addf %8, %9 : vector<8x128xf32>
    %cst_6 = arith.constant 0.000000e+00 : f32
    %11 = vector.broadcast %cst_6 : f32 to vector<8x128xf32>
    %12 = arith.maximumf %10, %11 : vector<8x128xf32>
    %cst_7 = arith.constant dense<0.000000e+00> : vector<8x128xf32>
    %13 = tpu.matmul %12, %2, %cst_7 {dimension_numbers = #tpu.dot_dimension_numbers<[1], [0], [0], [1], [0, 0, 1, 1], [], []>} : vector<8x128xf32>, vector<128x128xf32>, vector<8x128xf32> -> vector<8x128xf32>
    %14 = vector.broadcast %6 : vector<1x128xf32> to vector<8x128xf32>
    %15 = arith.addf %13, %14 : vector<8x128xf32>
    %cst_8 = arith.constant 0.000000e+00 : f32
    %16 = vector.broadcast %cst_8 : f32 to vector<8x128xf32>
    %17 = arith.maximumf %15, %16 : vector<8x128xf32>
    %cst_9 = arith.constant dense<0.000000e+00> : vector<8x128xf32>
    %18 = tpu.matmul %17, %3, %cst_9 {dimension_numbers = #tpu.dot_dimension_numbers<[1], [0], [0], [1], [0, 0, 1, 1], [], []>} : vector<8x128xf32>, vector<128x128xf32>, vector<8x128xf32> -> vector<8x128xf32>
    %19 = vector.broadcast %7 : vector<1x128xf32> to vector<8x128xf32>
    %20 = arith.addf %18, %19 : vector<8x128xf32>
    %21 = vector.extract_strided_slice %20 {offsets = [0, 0], sizes = [8, 4], strides = [1, 1]} : vector<8x128xf32> to vector<8x4xf32>
    %c0_10 = arith.constant 0 : index
    %c0_11 = arith.constant 0 : index
    %22 = vector.load %arg3[%c0_10, %c0_11] : memref<8x4xf32, #tpu.memory_space<vmem>>, vector<8x4xf32>
    tpu.vector_store %arg3[%c0_10, %c0_11], %21 {strides = array<i32>} : memref<8x4xf32, #tpu.memory_space<vmem>>, vector<8x4xf32>,
    return
  }
  func.func @transform_0(%arg0: i32) -> (i32, i32) {
    %c0_i32 = arith.constant 0 : i32
    %c0_i32_0 = arith.constant 0 : i32
    return %arg0, %c0_i32 : i32, i32
  }
  func.func @transform_1(%arg0: i32) -> (i32, i32) {
    %c0_i32 = arith.constant 0 : i32
    %c0_i32_0 = arith.constant 0 : i32
    %c0_i32_1 = arith.constant 0 : i32
    return %c0_i32, %c0_i32_0 : i32, i32
  }
  func.func @transform_2(%arg0: i32) -> (i32, i32) {
    %c0_i32 = arith.constant 0 : i32
    %c0_i32_0 = arith.constant 0 : i32
    return %arg0, %c0_i32 : i32, i32
  }
}

</mosaic_0001>

<llo_original>
// kernel: policy_forward.1
$region0: #{policy_forward.1}
  #allocation0 [shape = 'u32[]', space=smem, size = 0x4, offset = 0x4, fixed_abs, tag = 'smem constant byte address 0x4 - core index']
  #allocation1 [shape = 'u32[144,128]{1,0:T(1,128)}', space=vmem, size = 0x12000, scoped, tag = 'internal scratch']
  %s0 = inlined_call_operand.vmem [shape: f32[8,8], index: 0, kind: input, shape index: {}]
  %s1 = inlined_call_operand.hbm [shape: f32[392,128], index: 1, kind: input, shape index: {}]
  %s2 = inlined_call_operand.vmem [shape: f32[8,4], index: 2, kind: output, shape index: {}]
  %s3 = sld [smem:[#allocation0]]
  $region22: #{policy_forward.1} parent=0
    _
  %s5 = ssub.s32 1, %s3
  %s6 = scalar_select 0, %s5, %s3
  $region1: #{policy_forward.1} parent=0
    #allocation2 [shape = 'u8[200704]{0}', space=vmem, size = 0x31000, scoped, tag = 'input window, operand 1, single buffered']
    #allocation3 [shape = 's32[1]{0}', space=sflag, size = 0x4, scoped, tag = 'scoped memory for policy_forward.1']
    %7 = vsyncpa [#allocation3], 0
    // Predicated region
    $region2: #{policy_forward.1} parent=1 // pred_check
      _
    $region3: #{policy_forward.1} parent=1 // pred_check_branch
      %9 = sbr.rel (0) target = $region5
    $region4: #{policy_forward.1} parent=1 // pred_region
      _
    $region5: #{policy_forward.1} parent=1 // pred_fallthru
      _
    // Predicated region
    $region6: #{policy_forward.1} parent=1 // pred_check
      _
    $region7: #{policy_forward.1} parent=1 // pred_check_branch
      %11 = sbr.rel (0) target = $region9
    $region8: #{policy_forward.1} parent=1 // pred_region
      %s13 = ssub.s32 6272, 6272
      %14 = vsyncadd [#allocation3], %s13
      %s15 = sshll.u32 [#allocation2], 4
      %s16 = int_to_ptr.vmem [resolvable:$true] %s15
      %21 = dma.hbm_to_vmem [thread:$0]  %s1, 6272, %s16, [#allocation3], 128, 128, 8
    $region9: #{policy_forward.1} parent=1 // pred_fallthru
      _
    // Predicated region
    $region10: #{policy_forward.1} parent=1 // pred_check
      _
    $region11: #{policy_forward.1} parent=1 // pred_check_branch
      %23 = sbr.rel (0) target = $region13
    $region12: #{policy_forward.1} parent=1 // pred_region
      %24 = dma.done [#allocation3], 6272
    $region13: #{policy_forward.1} parent=1 // pred_fallthru
      _
    %v25 = vld [vmem:[%s0] sm:$0xff]
    %v26 = vld [vmem:[#allocation2] sm:$0xff]
    %v27 = vld [vmem:[#allocation2 + $0x80] sm:$0xff]
    %v28 = vld [vmem:[#allocation2 + $0x88] sm:$0xff]
    %v29 = vld [vmem:[#allocation2 + $0x90] sm:$0xff]
    %v30 = vld [vmem:[#allocation2 + $0x98] sm:$0xff]
    %v31 = vld [vmem:[#allocation2 + $0xa0] sm:$0xff]
    %v32 = vld [vmem:[#allocation2 + $0xa8] sm:$0xff]
    %v33 = vld [vmem:[#allocation2 + $0xb0] sm:$0xff]
    %v34 = vld [vmem:[#allocation2 + $0xb8] sm:$0xff]
    %v35 = vld [vmem:[#allocation2 + $0xc0] sm:$0xff]
    %v36 = vld [vmem:[#allocation2 + $0xc8] sm:$0xff]
    %v37 = vld [vmem:[#allocation2 + $0xd0] sm:$0xff]
    %v38 = vld [vmem:[#allocation2 + $0xd8] sm:$0xff]
    %v39 = vld [vmem:[#allocation2 + $0xe0] sm:$0xff]
    %v40 = vld [vmem:[#allocation2 + $0xe8] sm:$0xff]
    %v41 = vld [vmem:[#allocation2 + $0xf0] sm:$0xff]
    %v42 = vld [vmem:[#allocation2 + $0xf8] sm:$0xff]
    %v43 = vld [vmem:[#allocation2 + $0x100] sm:$0xff]
    %v44 = vld [vmem:[#allocation2 + $0x108] sm:$0xff]
    %v45 = vld [vmem:[#allocation2 + $0x110] sm:$0xff]
    %v46 = vld [vmem:[#allocation2 + $0x118] sm:$0xff]
    %v47 = vld [vmem:[#allocation2 + $0x120] sm:$0xff]
    %v48 = vld [vmem:[#allocation2 + $0x128] sm:$0xff]
    %v49 = vld [vmem:[#allocation2 + $0x130] sm:$0xff]
    %v50 = vld [vmem:[#allocation2 + $0x138] sm:$0xff]
    %v51 = vld [vmem:[#allocation2 + $0x140] sm:$0xff]
    %v52 = vld [vmem:[#allocation2 + $0x148] sm:$0xff]
    %v53 = vld [vmem:[#allocation2 + $0x150] sm:$0xff]
    %v54 = vld [vmem:[#allocation2 + $0x158] sm:$0xff]
    %v55 = vld [vmem:[#allocation2 + $0x160] sm:$0xff]
    %v56 = vld [vmem:[#allocation2 + $0x168] sm:$0xff]
    %v57 = vld [vmem:[#allocation2 + $0x170] sm:$0xff]
    %v58 = vld [vmem:[#allocation2 + $0x178] sm:$0xff]
    %v59 = vld [vmem:[#allocation2 + $0x180] sm:$0xff]
    %v60 = vlaneseq
    %v61 = vshrl.u32 %v60, 7
    %v62 = vsub.s32 0, %v61
    %v63 = vrot.slane %v59, %v62
    %vm64 = vcmask 64512
    %v66 = vsel %vm64, %v25, 0
    %68 = vmatprep.subr.mxu0 0.0
    %69 = vmatpush1.msra.mxu0 %v26
    %70 = vmatprep.subr.mxu0 0.0
    %71 = vmatpush1.msra.mxu0 0.0
    %72 = vmatprep.subr.mxu0 0.0
    %73 = vmatpush1.msra.mxu0 0.0
    %74 = vmatprep.subr.mxu0 0.0
    %75 = vmatpush1.msra.mxu0 0.0
    %76 = vmatprep.subr.mxu0 0.0
    %77 = vmatpush1.msra.mxu0 0.0
    %78 = vmatprep.subr.mxu0 0.0
    %79 = vmatpush1.msra.mxu0 0.0
    %80 = vmatprep.subr.mxu0 0.0
    %81 = vmatpush1.msra.mxu0 0.0
    %82 = vmatprep.subr.mxu0 0.0
    %83 = vmatpush1.msra.mxu0 0.0
    %84 = vmatprep.subr.mxu0 0.0
    %85 = vmatpush1.msra.mxu0 0.0
    %86 = vmatprep.subr.mxu0 0.0
    %87 = vmatpush1.msra.mxu0 0.0
    %88 = vmatprep.subr.mxu0 0.0
    %89 = vmatpush1.msra.mxu0 0.0
    %90 = vmatprep.subr.mxu0 0.0
    %91 = vmatpush1.msra.mxu0 0.0
    %92 = vmatprep.subr.mxu0 0.0
    %93 = vmatpush1.msra.mxu0 0.0
    %94 = vmatprep.subr.mxu0 0.0
    %95 = vmatpush1.msra.mxu0 0.0
    %96 = vmatprep.subr.mxu0 0.0
    %97 = vmatpush1.msra.mxu0 0.0
    %98 = vmatprep.subr.mxu0 0.0
    %99 = vmatpush1.msra.mxu0 0.0
    %100 = vmatprep.subr.mxu0 0.0
    %101 = vmatpush1.msra.mxu0 0.0
    %102 = vmatprep.subr.mxu0 0.0
    %103 = vmatpush1.msra.mxu0 0.0
    %104 = vmatprep.subr.mxu0 0.0
    %105 = vmatpush1.msra.mxu0 0.0
    %106 = vmatprep.subr.mxu0 0.0
    %107 = vmatpush1.msra.mxu0 0.0
    %108 = vmatprep.subr.mxu0 0.0
    %109 = vmatpush1.msra.mxu0 0.0
    %110 = vmatprep.subr.mxu0 0.0
    %111 = vmatpush1.msra.mxu0 0.0
    %112 = vmatprep.subr.mxu0 0.0
    %113 = vmatpush1.msra.mxu0 0.0
    %114 = vmatprep.subr.mxu0 0.0
    %115 = vmatpush1.msra.mxu0 0.0
    %116 = vmatprep.subr.mxu0 0.0
    %117 = vmatpush1.msra.mxu0 0.0
    %118 = vmatprep.subr.mxu0 0.0
    %119 = vmatpush1.msra.mxu0 0.0
    %120 = vmatprep.subr.mxu0 0.0
    %121 = vmatpush1.msra.mxu0 0.0
    %122 = vmatprep.subr.mxu0 0.0
    %123 = vmatpush1.msra.mxu0 0.0
    %124 = vmatprep.subr.mxu0 0.0
    %125 = vmatpush1.msra.mxu0 0.0
    %126 = vmatprep.subr.mxu0 0.0
    %127 = vmatpush1.msra.mxu0 0.0
    %128 = vmatprep.subr.mxu0 0.0
    %129 = vmatpush1.msra.mxu0 0.0
    %130 = vmatprep.subr.mxu0 0.0
    %131 = vmatpush1.msra.mxu0 0.0
    %132 = vmatprep.mubr.f32.mxu0 0.0
    %133 = vmatmul.mubr.f32.gmra.mrb[0].mxu0 %v66
    %v134 = vpop.f32.mrb[0].mxu0
    %v135 = vadd.f32 %v63, %v134
    %v136 = vpop.f32.mrb[0].mxu0
    %137 = vdwg.mxu0
    %v138 = vmax.f32 %v135, 0.0
    %v139 = vlaneseq
    %v140 = vshrl.u32 %v139, 7
    %v141 = vsub.s32 1, %v140
    %v142 = vrot.slane %v59, %v141
    %143 = vmatprep.subr.mxu0 0.0
    %144 = vmatpush1.msra.mxu0 %v27
    %145 = vmatprep.subr.mxu0 0.0
    %146 = vmatpush1.msra.mxu0 %v28
    %147 = vmatprep.subr.mxu0 0.0
    %148 = vmatpush1.msra.mxu0 %v29
    %149 = vmatprep.subr.mxu0 0.0
    %150 = vmatpush1.msra.mxu0 %v30
    %151 = vmatprep.subr.mxu0 0.0
    %152 = vmatpush1.msra.mxu0 %v31
    %153 = vmatprep.subr.mxu0 0.0
    %154 = vmatpush1.msra.mxu0 %v32
    %155 = vmatprep.subr.mxu0 0.0
    %156 = vmatpush1.msra.mxu0 %v33
    %157 = vmatprep.subr.mxu0 0.0
    %158 = vmatpush1.msra.mxu0 %v34
    %159 = vmatprep.subr.mxu0 0.0
    %160 = vmatpush1.msra.mxu0 %v35
    %161 = vmatprep.subr.mxu0 0.0
    %162 = vmatpush1.msra.mxu0 %v36
    %163 = vmatprep.subr.mxu0 0.0
    %164 = vmatpush1.msra.mxu0 %v37
    %165 = vmatprep.subr.mxu0 0.0
    %166 = vmatpush1.msra.mxu0 %v38
    %167 = vmatprep.subr.mxu0 0.0
    %168 = vmatpush1.msra.mxu0 %v39
    %169 = vmatprep.subr.mxu0 0.0
    %170 = vmatpush1.msra.mxu0 %v40
    %171 = vmatprep.subr.mxu0 0.0
    %172 = vmatpush1.msra.mxu0 %v41
    %173 = vmatprep.subr.mxu0 0.0
    %174 = vmatpush1.msra.mxu0 %v42
    %175 = vmatprep.subr.mxu0 0.0
    %176 = vmatpush1.msra.mxu0 0.0
    %177 = vmatprep.subr.mxu0 0.0
    %178 = vmatpush1.msra.mxu0 0.0
    %179 = vmatprep.subr.mxu0 0.0
    %180 = vmatpush1.msra.mxu0 0.0
    %181 = vmatprep.subr.mxu0 0.0
    %182 = vmatpush1.msra.mxu0 0.0
    %183 = vmatprep.subr.mxu0 0.0
    %184 = vmatpush1.msra.mxu0 0.0
    %185 = vmatprep.subr.mxu0 0.0
    %186 = vmatpush1.msra.mxu0 0.0
    %187 = vmatprep.subr.mxu0 0.0
    %188 = vmatpush1.msra.mxu0 0.0
    %189 = vmatprep.subr.mxu0 0.0
    %190 = vmatpush1.msra.mxu0 0.0
    %191 = vmatprep.subr.mxu0 0.0
    %192 = vmatpush1.msra.mxu0 0.0
    %193 = vmatprep.subr.mxu0 0.0
    %194 = vmatpush1.msra.mxu0 0.0
    %195 = vmatprep.subr.mxu0 0.0
    %196 = vmatpush1.msra.mxu0 0.0
    %197 = vmatprep.subr.mxu0 0.0
    %198 = vmatpush1.msra.mxu0 0.0
    %199 = vmatprep.subr.mxu0 0.0
    %200 = vmatpush1.msra.mxu0 0.0
    %201 = vmatprep.subr.mxu0 0.0
    %202 = vmatpush1.msra.mxu0 0.0
    %203 = vmatprep.subr.mxu0 0.0
    %204 = vmatpush1.msra.mxu0 0.0
    %205 = vmatprep.subr.mxu0 0.0
    %206 = vmatpush1.msra.mxu0 0.0
    %207 = vmatprep.mubr.f32.mxu0 0.0
    %208 = vmatmul.mubr.f32.gmra.mrb[0].mxu0 %v138
    %v209 = vpop.f32.mrb[0].mxu0
    %v210 = vadd.f32 %v142, %v209
    %v211 = vpop.f32.mrb[0].mxu0
    %212 = vdwg.mxu0
    %v213 = vmax.f32 %v210, 0.0
    %v214 = vlaneseq
    %v215 = vshrl.u32 %v214, 7
    %v216 = vsub.s32 2, %v215
    %v217 = vrot.slane %v59, %v216
    %218 = vmatprep.subr.mxu0 0.0
    %219 = vmatpush1.msra.mxu0 %v43
    %220 = vmatprep.subr.mxu0 0.0
    %221 = vmatpush1.msra.mxu0 %v44
    %222 = vmatprep.subr.mxu0 0.0
    %223 = vmatpush1.msra.mxu0 %v45
    %224 = vmatprep.subr.mxu0 0.0
    %225 = vmatpush1.msra.mxu0 %v46
    %226 = vmatprep.subr.mxu0 0.0
    %227 = vmatpush1.msra.mxu0 %v47
    %228 = vmatprep.subr.mxu0 0.0
    %229 = vmatpush1.msra.mxu0 %v48
    %230 = vmatprep.subr.mxu0 0.0
    %231 = vmatpush1.msra.mxu0 %v49
    %232 = vmatprep.subr.mxu0 0.0
    %233 = vmatpush1.msra.mxu0 %v50
    %234 = vmatprep.subr.mxu0 0.0
    %235 = vmatpush1.msra.mxu0 %v51
    %236 = vmatprep.subr.mxu0 0.0
    %237 = vmatpush1.msra.mxu0 %v52
    %238 = vmatprep.subr.mxu0 0.0
    %239 = vmatpush1.msra.mxu0 %v53
    %240 = vmatprep.subr.mxu0 0.0
    %241 = vmatpush1.msra.mxu0 %v54
    %242 = vmatprep.subr.mxu0 0.0
    %243 = vmatpush1.msra.mxu0 %v55
    %244 = vmatprep.subr.mxu0 0.0
    %245 = vmatpush1.msra.mxu0 %v56
    %246 = vmatprep.subr.mxu0 0.0
    %247 = vmatpush1.msra.mxu0 %v57
    %248 = vmatprep.subr.mxu0 0.0
    %249 = vmatpush1.msra.mxu0 %v58
    %250 = vmatprep.subr.mxu0 0.0
    %251 = vmatpush1.msra.mxu0 0.0
    %252 = vmatprep.subr.mxu0 0.0
    %253 = vmatpush1.msra.mxu0 0.0
    %254 = vmatprep.subr.mxu0 0.0
    %255 = vmatpush1.msra.mxu0 0.0
    %256 = vmatprep.subr.mxu0 0.0
    %257 = vmatpush1.msra.mxu0 0.0
    %258 = vmatprep.subr.mxu0 0.0
    %259 = vmatpush1.msra.mxu0 0.0
    %260 = vmatprep.subr.mxu0 0.0
    %261 = vmatpush1.msra.mxu0 0.0
    %262 = vmatprep.subr.mxu0 0.0
    %263 = vmatpush1.msra.mxu0 0.0
    %264 = vmatprep.subr.mxu0 0.0
    %265 = vmatpush1.msra.mxu0 0.0
    %266 = vmatprep.subr.mxu0 0.0
    %267 = vmatpush1.msra.mxu0 0.0
    %268 = vmatprep.subr.mxu0 0.0
    %269 = vmatpush1.msra.mxu0 0.0
    %270 = vmatprep.subr.mxu0 0.0
    %271 = vmatpush1.msra.mxu0 0.0
    %272 = vmatprep.subr.mxu0 0.0
    %273 = vmatpush1.msra.mxu0 0.0
    %274 = vmatprep.subr.mxu0 0.0
    %275 = vmatpush1.msra.mxu0 0.0
    %276 = vmatprep.subr.mxu0 0.0
    %277 = vmatpush1.msra.mxu0 0.0
    %278 = vmatprep.subr.mxu0 0.0
    %279 = vmatpush1.msra.mxu0 0.0
    %280 = vmatprep.subr.mxu0 0.0
    %281 = vmatpush1.msra.mxu0 0.0
    %282 = vmatprep.mubr.f32.mxu0 0.0
    %283 = vmatmul.mubr.f32.gmra.mrb[0].mxu0 %v213
    %v284 = vpop.f32.mrb[0].mxu0
    %v285 = vadd.f32 %v217, %v284
    %v286 = vpop.f32.mrb[0].mxu0
    %287 = vdwg.mxu0
    %vm288 = vcmask 31744
    %289 = vst.msk [vmem:[%s2] sm:$0xff] %vm288, %v285
    // Predicated region
    $region14: #{policy_forward.1} parent=1 // pred_check
      _
    $region15: #{policy_forward.1} parent=1 // pred_check_branch
      %291 = sbr.rel (0) target = $region17
    $region16: #{policy_forward.1} parent=1 // pred_region
      _
    $region17: #{policy_forward.1} parent=1 // pred_fallthru
      _
    // Predicated region
    $region18: #{policy_forward.1} parent=1 // pred_check
      _
    $region19: #{policy_forward.1} parent=1 // pred_check_branch
      %293 = sbr.rel (0) target = $region21
    $region20: #{policy_forward.1} parent=1 // pred_region
      _
    $region21: #{policy_forward.1} parent=1 // pred_fallthru
      _
    %294 = vsyncpa [#allocation3], 1

</llo_original>
